<compile_context>
chip_gen: v7x
topology: tpu7x:2x2x1
jax: 0.10.0
libtpu: 0.0.40
codegen_flags: <defaults>
</compile_context>

<pallas_src>
import functools

import jax
import jax.numpy as jnp
from jax import lax
from jax.experimental import pallas as pl
from jax.experimental.pallas import tpu as pltpu


def _row_mean_kernel(x_ref, out_ref, acc_ref, *, inv_numel, tn, numel, grid_n):
    """Accumulate row sums of one (tr, tn) tile; finalize on the last numel step."""
    j = pl.program_id(1)
    last_j = grid_n - 1                      # static

    @pl.when(j == 0)
    def _init():
        acc_ref[...] = jnp.zeros_like(acc_ref)

    n_full = tn // 128
    rem = tn - n_full * 128                  # ragged lane tail (only when grid_n == 1)

    def _accumulate(*, last_block):
        # Stream lane-aligned 128-wide chunks of the tile into the lane-dense
        # (tr, 128) f32 accumulator with plain VPU adds (no steady-state XLU work).
        acc = acc_ref[...]
        for c in range(n_full):
            if last_block:
                start = last_j * tn + c * 128            # static column offset
                if start >= numel:                       # fully out of bounds: skip
                    continue
            chunk = x_ref[:, c * 128:(c + 1) * 128].astype(jnp.float32)
            if last_block and start + 128 > numel:       # straddles numel: mask once
                col = start + lax.broadcasted_iota(jnp.int32, chunk.shape, 1)
                chunk = jnp.where(col < numel, chunk, 0.0)
            acc = acc + chunk
        if rem:
            # Ragged lane tail: only possible for a single full-extent block
            # (tn == numel, grid_n == 1), so a one-off XLU reduce is fine.
            tail = x_ref[:, n_full * 128:].astype(jnp.float32)
            tail_sum = jnp.sum(tail, axis=1, keepdims=True)          # (tr, 1)
            lane = lax.broadcasted_iota(jnp.int32, acc.shape, 1)
            acc = acc + jnp.where(lane == 0, tail_sum, 0.0)
        acc_ref[...] = acc

    last_needs_mask = (numel % tn != 0) and grid_n > 1
    if grid_n == 1:
        _accumulate(last_block=False)        # single step; `rem` handles any ragged tail
    elif last_needs_mask:
        # Keep the hot loop mask-free; mask only on the final column tile.
        @pl.when(j != last_j)
        def _steady():
            _accumulate(last_block=False)

        @pl.when(j == last_j)
        def _masked_tail():
            _accumulate(last_block=True)
    else:
        _accumulate(last_block=False)

    @pl.when(j == last_j)
    def _finalize():
        row_sum = jnp.sum(acc_ref[...], axis=1, keepdims=True)       # (tr, 1), one XLU reduce
        out_ref[...] = (row_sum * inv_numel).astype(out_ref.dtype)


def _pick_tiles(R, numel, itemsize, target_block_bytes):
    """Choose (tr, tn): row tile (multiple of 8 or full R) and lane tile (multiple of 128)."""
    # --- row tile ---
    if R <= 512:
        # Keep all rows resident; split in half when cleanly possible so the
        # "parallel" row axis gives v7x's second TensorCore work.
        tr = R // 2 if (R >= 16 and R % 16 == 0) else R
    else:
        tr = 512                 # multiple of 8; trailing row block may overhang (Pallas masks it)

    # --- lane tile: sized from the per-step VMEM budget ---
    tn = (target_block_bytes // (tr * itemsize)) // 128 * 128
    tn = max(128, min(tn, 128 * 128))        # cap keeps the in-kernel chunk unroll <= 128
    if tn >= numel:
        tn = numel               # single full-extent block (bypasses 128-divisibility)
    return tr, tn


def subnet_mean_forward(input_, *, target_block_bytes=2 * 1024 * 1024):
    """Per-row mean of a 2-D (rows, numel) array.  Returns shape (rows,)."""
    R, numel = input_.shape
    inv_numel = 1.0 / float(numel)           # static constant, closed over
    itemsize = jnp.dtype(input_.dtype).itemsize

    tr, tn = _pick_tiles(R, numel, itemsize, target_block_bytes)
    grid_r = pl.cdiv(R, tr)
    grid_n = pl.cdiv(numel, tn)

    kernel = functools.partial(
        _row_mean_kernel,
        inv_numel=inv_numel,
        tn=tn,
        numel=numel,
        grid_n=grid_n,
    )

    out2d = pl.pallas_call(
        kernel,
        out_shape=jax.ShapeDtypeStruct((R, 1), input_.dtype),
        grid_spec=pltpu.PrefetchScalarGridSpec(
            num_scalar_prefetch=0,
            grid=(grid_r, grid_n),
            in_specs=[pl.BlockSpec((tr, tn), lambda r, j: (r, j))],
            out_specs=pl.BlockSpec((tr, 1), lambda r, j: (r, 0)),
            scratch_shapes=[pltpu.VMEM((tr, 128), jnp.float32)],
        ),
        compiler_params=pltpu.CompilerParams(
            # Rows are independent -> "parallel" (v7x megacore); numel is the
            # reduction axis -> innermost, "arbitrary".
            dimension_semantics=("parallel", "arbitrary"),
        ),
        cost_estimate=pl.CostEstimate(
            flops=2 * R * numel,
            transcendentals=0,
            bytes_accessed=R * numel * itemsize + R * itemsize,
        ),
    )(input_)

    return out2d.reshape(R)


if __name__ == "__main__":
    key = jax.random.PRNGKey(0)

    # Shapes consistent with the module: a channel-major flattened activation
    # (rows = C = 4, numel = N*H*W = 2*16*16 = 512).
    N, C, H, W = 2, 4, 16, 16
    numel = N * H * W
    input_ = jax.random.normal(key, (C, numel), dtype=jnp.float32)
    ref_mean = jnp.sum(input_ / numel, axis=1)   # exact module op order

    # 1) Default tiling (single full-extent block).
    mean = subnet_mean_forward(input_)
    jax.block_until_ready(mean)
    assert mean.shape == (C,)
    assert jnp.allclose(mean, ref_mean, atol=1e-5, rtol=1e-5)

    # 2) Tiny block budget -> multi-step reduction grid (exercises the pipeline,
    #    init/finalize gating and the lane-dense accumulator).
    mean_tiled = subnet_mean_forward(input_, target_block_bytes=2048)
    jax.block_until_ready(mean_tiled)
    assert jnp.allclose(mean_tiled, ref_mean, atol=1e-5, rtol=1e-5)

    # 3) Ragged numel + row-split grid -> exercises the masked last step and the
    #    "parallel" row axis (tr = R // 2).
    x2 = jax.random.normal(jax.random.PRNGKey(0), (16, 400), dtype=jnp.float32)
    ref2 = jnp.sum(x2 / 400.0, axis=1)
    got2 = subnet_mean_forward(x2, target_block_bytes=4096)
    jax.block_until_ready(got2)
    assert got2.shape == (16,)
    assert jnp.allclose(got2, ref2, atol=1e-5, rtol=1e-5)

    # 4) No-transpose path for an NCHW activation: contiguous reshape to (N*C, H*W),
    #    row-reduce with the kernel, then do the tiny (N, C) -> (C,) average in plain
    #    JAX (avoids 2 extra HBM passes of a channel-major transpose).
    x_nchw = jax.random.normal(key, (N, C, H, W), dtype=jnp.float32)
    per_row = subnet_mean_forward(x_nchw.reshape(N * C, H * W))
    per_channel = per_row.reshape(N, C).mean(axis=0)
    jax.block_until_ready(per_channel)
    assert jnp.allclose(per_channel, x_nchw.mean(axis=(0, 2, 3)), atol=1e-5, rtol=1e-5)

    print("KERNEL_OK")
</pallas_src>

<mosaic_0001>
module attributes {stable_mosaic.version = 11 : i64} {
  func.func @_row_mean_kernel(%arg0: i32, %arg1: i32, %arg2: memref<4x512xf32, #tpu.memory_space<vmem>>, %arg3: memref<4x1xf32, #tpu.memory_space<vmem>>, %arg4: memref<4x128xf32, #tpu.memory_space<vmem>>) attributes {dimension_semantics = [#tpu.dimension_semantics<parallel>, #tpu.dimension_semantics<arbitrary>], iteration_bounds = array<i64: 1, 1>, scalar_prefetch = 0 : i64, scratch_operands = 1 : i64, tpu.core_type = #tpu.core_type<tc>, window_params = [{transform_indices = @transform_0, window_bounds = array<i64: 4, 512>}, {transform_indices = @transform_1, window_bounds = array<i64: 4, 1>}]} {
    %c0_i32 = arith.constant 0 : i32
    %0 = arith.cmpi eq, %arg1, %c0_i32 : i32
    %1 = arith.extui %0 : i1 to i32
    %c0_i32_0 = arith.constant 0 : i32
    %2 = arith.cmpi ne, %1, %c0_i32_0 : i32
    scf.if %2 {
      %cst = arith.constant 0.000000e+00 : f32
      %16 = vector.broadcast %cst : f32 to vector<4x128xf32>
      %c0_11 = arith.constant 0 : index
      %c0_12 = arith.constant 0 : index
      %17 = vector.load %arg4[%c0_11, %c0_12] : memref<4x128xf32, #tpu.memory_space<vmem>>, vector<4x128xf32>
      tpu.vector_store %arg4[%c0_11, %c0_12], %16 {strides = array<i32>} : memref<4x128xf32, #tpu.memory_space<vmem>>, vector<4x128xf32>,
    } else {
    }
    %c0 = arith.constant 0 : index
    %c0_1 = arith.constant 0 : index
    %3 = vector.load %arg4[%c0, %c0_1] : memref<4x128xf32, #tpu.memory_space<vmem>>, vector<4x128xf32>
    %c0_2 = arith.constant 0 : index
    %c0_3 = arith.constant 0 : index
    %4 = vector.load %arg2[%c0_2, %c0_3] : memref<4x512xf32, #tpu.memory_space<vmem>>, vector<4x128xf32>
    %5 = arith.addf %3, %4 : vector<4x128xf32>
    %c0_4 = arith.constant 0 : index
    %c128 = arith.constant 128 : index
    %6 = vector.load %arg2[%c0_4, %c128] : memref<4x512xf32, #tpu.memory_space<vmem>>, vector<4x128xf32>
    %7 = arith.addf %5, %6 : vector<4x128xf32>
    %c0_5 = arith.constant 0 : index
    %c256 = arith.constant 256 : index
    %8 = vector.load %arg2[%c0_5, %c256] : memref<4x512xf32, #tpu.memory_space<vmem>>, vector<4x128xf32>
    %9 = arith.addf %7, %8 : vector<4x128xf32>
    %c0_6 = arith.constant 0 : index
    %c384 = arith.constant 384 : index
    %10 = vector.load %arg2[%c0_6, %c384] : memref<4x512xf32, #tpu.memory_space<vmem>>, vector<4x128xf32>
    %11 = arith.addf %9, %10 : vector<4x128xf32>
    %c0_7 = arith.constant 0 : index
    %c0_8 = arith.constant 0 : index
    %12 = vector.load %arg4[%c0_7, %c0_8] : memref<4x128xf32, #tpu.memory_space<vmem>>, vector<4x128xf32>
    tpu.vector_store %arg4[%c0_7, %c0_8], %11 {strides = array<i32>} : memref<4x128xf32, #tpu.memory_space<vmem>>, vector<4x128xf32>,
    %c0_i32_9 = arith.constant 0 : i32
    %13 = arith.cmpi eq, %arg1, %c0_i32_9 : i32
    %14 = arith.extui %13 : i1 to i32
    %c0_i32_10 = arith.constant 0 : i32
    %15 = arith.cmpi ne, %14, %c0_i32_10 : i32
    scf.if %15 {
      %c0_11 = arith.constant 0 : index
      %c0_12 = arith.constant 0 : index
      %16 = vector.load %arg4[%c0_11, %c0_12] : memref<4x128xf32, #tpu.memory_space<vmem>>, vector<4x128xf32>
      %cst = arith.constant dense<0.000000e+00> : vector<4xf32>
      %17 = vector.multi_reduction <add>, %16, %cst [1] : vector<4x128xf32> to vector<4xf32>
      %18 = vector.shape_cast %17 : vector<4xf32> to vector<4x1xf32>
      %cst_13 = arith.constant 0.001953125 : f32
      %19 = vector.broadcast %cst_13 : f32 to vector<4x1xf32>
      %20 = arith.mulf %18, %19 : vector<4x1xf32>
      %c0_14 = arith.constant 0 : index
      %c0_15 = arith.constant 0 : index
      %21 = vector.load %arg3[%c0_14, %c0_15] : memref<4x1xf32, #tpu.memory_space<vmem>>, vector<4x1xf32>
      tpu.vector_store %arg3[%c0_14, %c0_15], %20 {strides = array<i32>} : memref<4x1xf32, #tpu.memory_space<vmem>>, vector<4x1xf32>,
    } else {
    }
    return
  }
  func.func @transform_0(%arg0: i32, %arg1: i32) -> (i32, i32) {
    %c0_i32 = arith.constant 0 : i32
    return %arg0, %arg1 : i32, i32
  }
  func.func @transform_1(%arg0: i32, %arg1: i32) -> (i32, i32) {
    %c0_i32 = arith.constant 0 : i32
    %c0_i32_0 = arith.constant 0 : i32
    return %arg0, %c0_i32 : i32, i32
  }
}

</mosaic_0001>

<llo_original>
// kernel: tpu_custom_call.1
$region0: #{tpu_custom_call.1}
  #allocation0 [shape = 'u32[]', space=smem, size = 0x4, offset = 0x4, fixed_abs, tag = 'smem constant byte address 0x4 - core index']
  #allocation1 [shape = 'u32[144,128]{1,0:T(1,128)}', space=vmem, size = 0x12000, scoped, tag = 'internal scratch']
  #allocation2 [shape = 'f32[4,128]{1,0:T(4,128)}', space=vmem, size = 0x800, scoped, tag = 'scratch operand']
  %s0 = inlined_call_operand.hbm [shape: f32[4,512], index: 0, kind: input, shape index: {}]
  %s1 = inlined_call_operand.vmem [shape: f32[4,1], index: 1, kind: output, shape index: {}]
  %s2 = sld [smem:[#allocation0]]
  $region26: #{tpu_custom_call.1} parent=0
    _
  %s4 = ssub.s32 1, %s2
  %s5 = scalar_select 0, %s4, %s2
  $region1: #{tpu_custom_call.1} parent=0
    #allocation3 [shape = 'u8[8192]{0}', space=vmem, size = 0x2000, scoped, tag = 'input window, operand 0, single buffered']
    #allocation4 [shape = 's32[1]{0}', space=sflag, size = 0x4, scoped, tag = 'scoped memory for tpu_custom_call.1']
    %6 = vsyncpa [#allocation4], 0
    // Predicated region
    $region2: #{tpu_custom_call.1} parent=1 // pred_check
      _
    $region3: #{tpu_custom_call.1} parent=1 // pred_check_branch
      %8 = sbr.rel (0) target = $region5
    $region4: #{tpu_custom_call.1} parent=1 // pred_region
      %s10 = ssub.s32 256, 256
      %11 = vsyncadd [#allocation4], %s10
      %s13 = sshll.u32 [#allocation3], 4
      %s14 = int_to_ptr.vmem [resolvable:$true] %s13
      %16 = dma.hbm_to_vmem [thread:$0]  %s0, 256, %s14, [#allocation4]
    $region5: #{tpu_custom_call.1} parent=1 // pred_fallthru
      _
    // Predicated region
    $region6: #{tpu_custom_call.1} parent=1 // pred_check
      _
    $region7: #{tpu_custom_call.1} parent=1 // pred_check_branch
      %18 = sbr.rel (0) target = $region9
    $region8: #{tpu_custom_call.1} parent=1 // pred_region
      %19 = dma.done [#allocation4], 256
    $region9: #{tpu_custom_call.1} parent=1 // pred_fallthru
      _
    %p20 = scmp.eq.s32.totalorder 0, 0
    // Predicated region
    $region10: #{tpu_custom_call.1} parent=1 // pred_check
      %p21 = pneg %p20
    $region11: #{tpu_custom_call.1} parent=1 // pred_check_branch
      %23 = sbr.rel (%p21) target = $region13
    $region12: #{tpu_custom_call.1} parent=1 // pred_region
      %24 = vst [vmem:[#allocation2] sm:$0xf] 0.0
    $region13: #{tpu_custom_call.1} parent=1 // pred_fallthru
      _
    %v25 = vld [vmem:[#allocation2] sm:$0xf]
    %v26 = vld [vmem:[#allocation3] sm:$0xf]
    %v27 = vadd.f32 %v25, %v26
    %v28 = vld [vmem:[#allocation3 + $0x4] sm:$0xf]
    %v29 = vadd.f32 %v27, %v28
    %v30 = vld [vmem:[#allocation3 + $0x8] sm:$0xf]
    %v31 = vadd.f32 %v29, %v30
    %v32 = vld [vmem:[#allocation3 + $0xc] sm:$0xf]
    %v33 = vadd.f32 %v31, %v32
    %34 = vst [vmem:[#allocation2] sm:$0xf] %v33
    // Predicated region
    $region14: #{tpu_custom_call.1} parent=1 // pred_check
      %p35 = pneg %p20
    $region15: #{tpu_custom_call.1} parent=1 // pred_check_branch
      %37 = sbr.rel (%p35) target = $region17
    $region16: #{tpu_custom_call.1} parent=1 // pred_region
      %v38 = vld [vmem:[#allocation2] sm:$0xf]
      %vm39 = vcmask 1043456
      %v40 = vsel %vm39, %v38, 0.0
      %41 = vadd.xlane.f32.xlu0 %v40
      %v42 = vpop.xlane.xlu0 %41
      %v43 = vmul.f32 %v42, 0.001953125
      %vm44 = vcmask 3072
      %45 = vst.msk [vmem:[%s1] sm:$0xf] %vm44, %v43
    $region17: #{tpu_custom_call.1} parent=1 // pred_fallthru
      _
    // Predicated region
    $region18: #{tpu_custom_call.1} parent=1 // pred_check
      _
    $region19: #{tpu_custom_call.1} parent=1 // pred_check_branch
      %47 = sbr.rel (0) target = $region21
    $region20: #{tpu_custom_call.1} parent=1 // pred_region
      _
    $region21: #{tpu_custom_call.1} parent=1 // pred_fallthru
      _
    // Predicated region
    $region22: #{tpu_custom_call.1} parent=1 // pred_check
      _
    $region23: #{tpu_custom_call.1} parent=1 // pred_check_branch
      %49 = sbr.rel (0) target = $region25
    $region24: #{tpu_custom_call.1} parent=1 // pred_region
      _
    $region25: #{tpu_custom_call.1} parent=1 // pred_fallthru
      _
    %50 = vsyncpa [#allocation4], 1

</llo_original>
